<compile_context>
chip_gen: v6e
topology: v6e:2x2x1
jax: 0.10.0
libtpu: 0.0.40
codegen_flags: <defaults>
</compile_context>

<pallas_src>
import functools
import math

import jax
import jax.numpy as jnp
from jax.experimental import pallas as pl
from jax.experimental.pallas import tpu as pltpu


def _round_up(x, n):
    return ((x + n - 1) // n) * n


def arc_margin_kernel(x_ref, w_ref, label_ref, out_ref, *,
                      s, cos_m, sin_m, th, mm, sub, easy_margin, tn):
    # x_ref: (TM, D) bf16, already L2-normalized.
    # w_ref: (sub, TN, D) bf16, already L2-normalized (sub-center blocked).
    # label_ref: (TM, 1) int32.
    # out_ref: (TM, TN) f32.
    x = x_ref[...]

    # cosine = max over sub-centers of x @ w_k.T  -> (TM, TN), f32 accumulate.
    cosine = None
    for k in range(sub):                       # sub is small & static
        wk = w_ref[k]                          # (TN, D)
        ck = jax.lax.dot_general(
            x, wk, (((1,), (1,)), ((), ())),
            preferred_element_type=jnp.float32)
        cosine = ck if cosine is None else jnp.maximum(cosine, ck)

    # Clamp before sqrt: bf16 rounding can push |cosine| marginally above 1.
    sine = jnp.sqrt(jnp.clip(1.0 - cosine * cosine, 0.0, 1.0))
    phi = cosine * cos_m - sine * sin_m
    if easy_margin:
        phi = jnp.where(cosine > 0.0, phi, cosine)
    else:
        phi = jnp.where(cosine - th > 0.0, phi, cosine - mm)

    # One-hot scatter -> single select against the global class index.
    j = pl.program_id(1)
    col = jax.lax.broadcasted_iota(jnp.int32, cosine.shape, 1) + j * tn
    label = label_ref[...]                     # (TM, 1)
    out_ref[...] = jnp.where(col == label, phi, cosine) * s


def arc_margin_product(x, weight, label, *,
                       out_features, s=32.0, m=0.5, sub=1, easy_margin=False,
                       tm=128, tn=512, mxu_dtype=jnp.bfloat16):
    """ArcMarginProduct.forward(x, label) with explicit weight (out*sub, in)."""
    B, D = x.shape
    C_sub, D_w = weight.shape
    assert D == D_w and C_sub == out_features * sub

    # --- hoisted normalization (rsqrt-multiply, eps matches F.normalize 1e-12)
    def l2n(a):
        a = a.astype(jnp.float32)
        ss = jnp.sum(a * a, axis=-1, keepdims=True)
        return a * jax.lax.rsqrt(jnp.maximum(ss, 1e-24))

    xn = l2n(x)
    # Reorder weight so each sub-center is a contiguous (out_features, D) slab:
    # row c of the original weight = (class c // sub, sub-center c % sub).
    wn = l2n(weight).reshape(out_features, sub, D).transpose(1, 0, 2)

    # --- tile sizes: sublane-aligned batch tile, lane-dense class tile
    tm = _round_up(max(8, min(tm, _round_up(B, 8))), 8)
    tn = _round_up(min(tn, _round_up(out_features, 128)), 128)
    b_pad = _round_up(B, tm)
    c_pad = _round_up(out_features, tn)

    xn = jnp.pad(xn, ((0, b_pad - B), (0, 0))).astype(mxu_dtype)
    wn = jnp.pad(wn, ((0, 0), (0, c_pad - out_features), (0, 0))).astype(mxu_dtype)
    label2d = jnp.pad(label.astype(jnp.int32).reshape(B, 1),
                      ((0, b_pad - B), (0, 0)))

    kernel = functools.partial(
        arc_margin_kernel,
        s=float(s),
        cos_m=math.cos(m),
        sin_m=math.sin(m),
        th=math.cos(math.pi - m),
        mm=math.sin(math.pi - m) * m,
        sub=int(sub),
        easy_margin=bool(easy_margin),
        tn=int(tn),
    )

    # Explicit VMEM budget: double-buffered inputs + double-buffered f32 output.
    itemsize = jnp.dtype(mxu_dtype).itemsize
    vmem_needed = (2 * (tm * D * itemsize + sub * tn * D * itemsize + tm * 4)
                   + 2 * tm * tn * 4)
    vmem_limit = min(max(2 * int(vmem_needed) + (4 << 20), 16 << 20), 64 << 20)

    grid = (b_pad // tm, c_pad // tn)

    out = pl.pallas_call(
        kernel,
        out_shape=jax.ShapeDtypeStruct((b_pad, c_pad), jnp.float32),
        grid=grid,
        in_specs=[
            pl.BlockSpec((tm, D), lambda i, j: (i, 0)),
            pl.BlockSpec((sub, tn, D), lambda i, j: (0, j, 0)),
            pl.BlockSpec((tm, 1), lambda i, j: (i, 0)),
        ],
        out_specs=pl.BlockSpec((tm, tn), lambda i, j: (i, j)),
        compiler_params=pltpu.CompilerParams(
            dimension_semantics=("parallel", "parallel"),
            vmem_limit_bytes=vmem_limit),
    )(xn, wn, label2d)

    return out[:B, :out_features]


def _reference(x, weight, label, *, out_features, s, m, sub, easy_margin):
    # Pure-JAX reference with the SAME numerics (rsqrt normalize, bf16 MXU
    # operands, f32 accumulate) as the kernel, following the PyTorch forward.
    def l2n(a):
        a = a.astype(jnp.float32)
        ss = jnp.sum(a * a, axis=-1, keepdims=True)
        return a * jax.lax.rsqrt(jnp.maximum(ss, 1e-24))

    xn = l2n(x).astype(jnp.bfloat16)
    wn = l2n(weight).astype(jnp.bfloat16)
    cosine = jax.lax.dot_general(xn, wn, (((1,), (1,)), ((), ())),
                                 preferred_element_type=jnp.float32)
    if sub > 1:
        cosine = jnp.max(cosine.reshape(-1, out_features, sub), axis=2)
    sine = jnp.sqrt(jnp.clip(1.0 - cosine * cosine, 0.0, 1.0))
    cos_m, sin_m = math.cos(m), math.sin(m)
    th, mm = math.cos(math.pi - m), math.sin(math.pi - m) * m
    phi = cosine * cos_m - sine * sin_m
    if easy_margin:
        phi = jnp.where(cosine > 0.0, phi, cosine)
    else:
        phi = jnp.where(cosine - th > 0.0, phi, cosine - mm)
    one_hot = jax.nn.one_hot(label, out_features, dtype=jnp.float32)
    return (one_hot * phi + (1.0 - one_hot) * cosine) * s


if __name__ == "__main__":
    # Module defaults: in_features=128, out_features=200, s=32.0, m=0.5.
    B, in_features, out_features = 8, 128, 200
    key = jax.random.PRNGKey(0)

    for sub in (1, 2):
        kx, kw, kl = jax.random.split(jax.random.fold_in(key, sub), 3)
        x = jax.random.normal(kx, (B, in_features), dtype=jnp.float32)

        # Deterministic xavier_uniform_-style init for the weight.
        fan_out, fan_in = out_features * sub, in_features
        bound = math.sqrt(6.0 / (fan_in + fan_out))
        weight = jax.random.uniform(kw, (fan_out, fan_in), dtype=jnp.float32,
                                    minval=-bound, maxval=bound)
        label = jax.random.randint(kl, (B,), 0, out_features, dtype=jnp.int32)

        out = arc_margin_product(x, weight, label,
                                 out_features=out_features, s=32.0, m=0.5,
                                 sub=sub, easy_margin=False)
        jax.block_until_ready(out)

        ref = _reference(x, weight, label, out_features=out_features,
                         s=32.0, m=0.5, sub=sub, easy_margin=False)

        assert out.shape == (B, out_features)
        assert jnp.allclose(out, ref, atol=1e-2, rtol=1e-2), (
            f"mismatch for sub={sub}: max abs err "
            f"{float(jnp.max(jnp.abs(out - ref)))}")

    print("KERNEL_OK")
</pallas_src>

<mosaic_0001>
module attributes {stable_mosaic.version = 11 : i64} {
  func.func @arc_margin_kernel(%arg0: i32, %arg1: i32, %arg2: memref<8x128xbf16, #tpu.memory_space<vmem>>, %arg3: memref<1x256x128xbf16, #tpu.memory_space<vmem>>, %arg4: memref<8x1xi32, #tpu.memory_space<vmem>>, %arg5: memref<8x256xf32, #tpu.memory_space<vmem>>) attributes {dimension_semantics = [#tpu.dimension_semantics<parallel>, #tpu.dimension_semantics<parallel>], iteration_bounds = array<i64: 1, 1>, scalar_prefetch = 0 : i64, scratch_operands = 0 : i64, tpu.core_type = #tpu.core_type<tc>, window_params = [{transform_indices = @transform_0, window_bounds = array<i64: 8, 128>}, {transform_indices = @transform_1, window_bounds = array<i64: 1, 256, 128>}, {transform_indices = @transform_2, window_bounds = array<i64: 8, 1>}, {transform_indices = @transform_3, window_bounds = array<i64: 8, 256>}]} {
    %c0 = arith.constant 0 : index
    %c0_0 = arith.constant 0 : index
    %0 = vector.load %arg2[%c0, %c0_0] : memref<8x128xbf16, #tpu.memory_space<vmem>>, vector<8x128xbf16>
    %c0_1 = arith.constant 0 : index
    %c0_2 = arith.constant 0 : index
    %c0_3 = arith.constant 0 : index
    %1 = vector.load %arg3[%c0_1, %c0_2, %c0_3] : memref<1x256x128xbf16, #tpu.memory_space<vmem>>, vector<1x256x128xbf16>
    %2 = vector.shape_cast %1 : vector<1x256x128xbf16> to vector<256x128xbf16>
    %cst = arith.constant dense<0.000000e+00> : vector<8x256xf32>
    %3 = tpu.matmul %0, %2, %cst {dimension_numbers = #tpu.dot_dimension_numbers<[1], [1], [0], [0], [0, 0, 1, 0], [], []>} : vector<8x128xbf16>, vector<256x128xbf16>, vector<8x256xf32> -> vector<8x256xf32>
    %4 = arith.mulf %3, %3 : vector<8x256xf32>
    %cst_4 = arith.constant 1.000000e+00 : f32
    %5 = vector.broadcast %cst_4 : f32 to vector<8x256xf32>
    %6 = arith.subf %5, %4 : vector<8x256xf32>
    %cst_5 = arith.constant 0.000000e+00 : f32
    %cst_6 = arith.constant 1.000000e+00 : f32
    %7 = vector.broadcast %cst_5 : f32 to vector<8x256xf32>
    %8 = arith.maximumf %7, %6 : vector<8x256xf32>
    %9 = vector.broadcast %cst_6 : f32 to vector<8x256xf32>
    %10 = arith.minimumf %9, %8 : vector<8x256xf32>
    %11 = math.sqrt %10 : vector<8x256xf32>
    %cst_7 = arith.constant 0.87758255 : f32
    %12 = vector.broadcast %cst_7 : f32 to vector<8x256xf32>
    %13 = arith.mulf %3, %12 : vector<8x256xf32>
    %cst_8 = arith.constant 0.47942555 : f32
    %14 = vector.broadcast %cst_8 : f32 to vector<8x256xf32>
    %15 = arith.mulf %11, %14 : vector<8x256xf32>
    %16 = arith.subf %13, %15 : vector<8x256xf32>
    %cst_9 = arith.constant -0.87758255 : f32
    %17 = vector.broadcast %cst_9 : f32 to vector<8x256xf32>
    %18 = arith.subf %3, %17 : vector<8x256xf32>
    %cst_10 = arith.constant 0.000000e+00 : f32
    %19 = vector.broadcast %cst_10 : f32 to vector<8x256xf32>
    %20 = arith.cmpf ogt, %18, %19 : vector<8x256xf32>
    %cst_11 = arith.constant 0.239712775 : f32
    %21 = vector.broadcast %cst_11 : f32 to vector<8x256xf32>
    %22 = arith.subf %3, %21 : vector<8x256xf32>
    %23 = arith.select %20, %16, %22 : vector<8x256xi1>, vector<8x256xf32>
    %24 = tpu.iota {dimensions = array<i32: 1>} : vector<8x256xi32>
    %c256_i32 = arith.constant 256 : i32
    %25 = arith.muli %arg1, %c256_i32 : i32
    %26 = vector.broadcast %25 : i32 to vector<8x256xi32>
    %27 = arith.addi %24, %26 : vector<8x256xi32>
    %c0_12 = arith.constant 0 : index
    %c0_13 = arith.constant 0 : index
    %28 = vector.load %arg4[%c0_12, %c0_13] : memref<8x1xi32, #tpu.memory_space<vmem>>, vector<8x1xi32>
    %29 = vector.broadcast %28 : vector<8x1xi32> to vector<8x256xi32>
    %30 = arith.cmpi eq, %27, %29 : vector<8x256xi32>
    %31 = arith.select %30, %23, %3 : vector<8x256xi1>, vector<8x256xf32>
    %cst_14 = arith.constant 3.200000e+01 : f32
    %32 = vector.broadcast %cst_14 : f32 to vector<8x256xf32>
    %33 = arith.mulf %31, %32 : vector<8x256xf32>
    %c0_15 = arith.constant 0 : index
    %c0_16 = arith.constant 0 : index
    %34 = vector.load %arg5[%c0_15, %c0_16] : memref<8x256xf32, #tpu.memory_space<vmem>>, vector<8x256xf32>
    tpu.vector_store %arg5[%c0_15, %c0_16], %33 {strides = array<i32>} : memref<8x256xf32, #tpu.memory_space<vmem>>, vector<8x256xf32>,
    return
  }
  func.func @transform_0(%arg0: i32, %arg1: i32) -> (i32, i32) {
    %c0_i32 = arith.constant 0 : i32
    %c0_i32_0 = arith.constant 0 : i32
    return %arg0, %c0_i32 : i32, i32
  }
  func.func @transform_1(%arg0: i32, %arg1: i32) -> (i32, i32, i32) {
    %c0_i32 = arith.constant 0 : i32
    %c0_i32_0 = arith.constant 0 : i32
    %c0_i32_1 = arith.constant 0 : i32
    return %c0_i32, %arg1, %c0_i32_0 : i32, i32, i32
  }
  func.func @transform_2(%arg0: i32, %arg1: i32) -> (i32, i32) {
    %c0_i32 = arith.constant 0 : i32
    %c0_i32_0 = arith.constant 0 : i32
    return %arg0, %c0_i32 : i32, i32
  }
  func.func @transform_3(%arg0: i32, %arg1: i32) -> (i32, i32) {
    %c0_i32 = arith.constant 0 : i32
    return %arg0, %arg1 : i32, i32
  }
}

</mosaic_0001>

<llo_original>
// kernel: tpu_custom_call.1
$region0: #{tpu_custom_call.1}
  #allocation0 [shape = 'u32[]', space=smem, size = 0x4, offset = 0x4, fixed_abs, tag = 'smem constant byte address 0x4 - core index']
  #allocation1 [shape = 'u32[144,128]{1,0:T(1,128)}', space=vmem, size = 0x12000, scoped, tag = 'internal scratch']
  %s0 = inlined_call_operand.vmem [shape: bf16[8,128], index: 0, kind: input, shape index: {}]
  %s1 = inlined_call_operand.hbm [shape: bf16[1,256,128], index: 1, kind: input, shape index: {}]
  %s2 = inlined_call_operand.vmem [shape: s32[8,1], index: 2, kind: input, shape index: {}]
  %s3 = inlined_call_operand.hbm [shape: f32[8,256], index: 3, kind: output, shape index: {}]
  %s4 = sld [smem:[#allocation0]]
  $region26: #{tpu_custom_call.1} parent=0
    _
  %s6 = ssub.s32 1, %s4
  %s7 = scalar_select 0, %s6, %s4
  $region1: #{tpu_custom_call.1} parent=0
    #allocation2 [shape = 'u8[65536]{0}', space=vmem, size = 0x10000, scoped, tag = 'input window, operand 1, single buffered']
    #allocation3 [shape = 's32[1]{0}', space=sflag, size = 0x4, scoped, tag = 'scoped memory for tpu_custom_call.1']
    #allocation4 [shape = 's32[1]{0}', space=sflag, size = 0x4, scoped, tag = 'scoped memory for tpu_custom_call.1']
    #allocation5 [shape = 'u8[8192]{0}', space=vmem, size = 0x2000, scoped, tag = 'output window, operand 0, single buffered']
    %8 = vsyncpa [#allocation3], 0
    %9 = vsyncpa [#allocation4], 0
    // Predicated region
    $region2: #{tpu_custom_call.1} parent=1 // pred_check
      _
    $region3: #{tpu_custom_call.1} parent=1 // pred_check_branch
      %11 = sbr.rel (0) target = $region5
    $region4: #{tpu_custom_call.1} parent=1 // pred_region
      _
    $region5: #{tpu_custom_call.1} parent=1 // pred_fallthru
      _
    // Predicated region
    $region6: #{tpu_custom_call.1} parent=1 // pred_check
      _
    $region7: #{tpu_custom_call.1} parent=1 // pred_check_branch
      %13 = sbr.rel (0) target = $region9
    $region8: #{tpu_custom_call.1} parent=1 // pred_region
      %s15 = ssub.s32 2048, 2048
      %16 = vsyncadd [#allocation3], %s15
      %s17 = sshll.u32 [#allocation2], 4
      %s18 = int_to_ptr.vmem [resolvable:$true] %s17
      %23 = dma.hbm_to_vmem [thread:$0]  %s1, 2048, %s18, [#allocation3], 64, 64, 4
    $region9: #{tpu_custom_call.1} parent=1 // pred_fallthru
      _
    // Predicated region
    $region10: #{tpu_custom_call.1} parent=1 // pred_check
      _
    $region11: #{tpu_custom_call.1} parent=1 // pred_check_branch
      %25 = sbr.rel (0) target = $region13
    $region12: #{tpu_custom_call.1} parent=1 // pred_region
      _
    $region13: #{tpu_custom_call.1} parent=1 // pred_fallthru
      _
    // Predicated region
    $region14: #{tpu_custom_call.1} parent=1 // pred_check
      _
    $region15: #{tpu_custom_call.1} parent=1 // pred_check_branch
      %27 = sbr.rel (0) target = $region17
    $region16: #{tpu_custom_call.1} parent=1 // pred_region
      %28 = dma.done [#allocation3], 2048
    $region17: #{tpu_custom_call.1} parent=1 // pred_fallthru
      _
    %v30 = vld [vmem:[%s0] sm:$0xf]
    %v31 = vld [vmem:[#allocation2] sm:$0xf]
    %v32 = vld [vmem:[#allocation2 + $0x4] sm:$0xf]
    %v33 = vld [vmem:[#allocation2 + $0x8] sm:$0xf]
    %v34 = vld [vmem:[#allocation2 + $0xc] sm:$0xf]
    %v35 = vld [vmem:[#allocation2 + $0x10] sm:$0xf]
    %v36 = vld [vmem:[#allocation2 + $0x14] sm:$0xf]
    %v37 = vld [vmem:[#allocation2 + $0x18] sm:$0xf]
    %v38 = vld [vmem:[#allocation2 + $0x1c] sm:$0xf]
    %v39 = vld [vmem:[#allocation2 + $0x20] sm:$0xf]
    %v40 = vld [vmem:[#allocation2 + $0x24] sm:$0xf]
    %v41 = vld [vmem:[#allocation2 + $0x28] sm:$0xf]
    %v42 = vld [vmem:[#allocation2 + $0x2c] sm:$0xf]
    %v43 = vld [vmem:[#allocation2 + $0x30] sm:$0xf]
    %v44 = vld [vmem:[#allocation2 + $0x34] sm:$0xf]
    %v45 = vld [vmem:[#allocation2 + $0x38] sm:$0xf]
    %v46 = vld [vmem:[#allocation2 + $0x3c] sm:$0xf]
    %v47 = vld [vmem:[#allocation2 + $0x40] sm:$0xf]
    %v48 = vld [vmem:[#allocation2 + $0x44] sm:$0xf]
    %v49 = vld [vmem:[#allocation2 + $0x48] sm:$0xf]
    %v50 = vld [vmem:[#allocation2 + $0x4c] sm:$0xf]
    %v51 = vld [vmem:[#allocation2 + $0x50] sm:$0xf]
    %v52 = vld [vmem:[#allocation2 + $0x54] sm:$0xf]
    %v53 = vld [vmem:[#allocation2 + $0x58] sm:$0xf]
    %v54 = vld [vmem:[#allocation2 + $0x5c] sm:$0xf]
    %v55 = vld [vmem:[#allocation2 + $0x60] sm:$0xf]
    %v56 = vld [vmem:[#allocation2 + $0x64] sm:$0xf]
    %v57 = vld [vmem:[#allocation2 + $0x68] sm:$0xf]
    %v58 = vld [vmem:[#allocation2 + $0x6c] sm:$0xf]
    %v59 = vld [vmem:[#allocation2 + $0x70] sm:$0xf]
    %v60 = vld [vmem:[#allocation2 + $0x74] sm:$0xf]
    %v61 = vld [vmem:[#allocation2 + $0x78] sm:$0xf]
    %v62 = vld [vmem:[#allocation2 + $0x7c] sm:$0xf]
    %v95 = vunpack.c.l.b16 %v31
    %v96 = vunpack.c.l.b16 %v32
    %v97 = vunpack.c.l.b16 %v33
    %v98 = vunpack.c.l.b16 %v34
    %v99 = vunpack.c.l.b16 %v35
    %v100 = vunpack.c.l.b16 %v36
    %v101 = vunpack.c.l.b16 %v37
    %v102 = vunpack.c.l.b16 %v38
    %v103 = vunpack.c.l.b16 %v39
    %v104 = vunpack.c.l.b16 %v40
    %v105 = vunpack.c.l.b16 %v41
    %v106 = vunpack.c.l.b16 %v42
    %v107 = vunpack.c.l.b16 %v43
    %v108 = vunpack.c.l.b16 %v44
    %v109 = vunpack.c.l.b16 %v45
    %v110 = vunpack.c.l.b16 %v46
    %v111 = vunpack.c.l.b16 %v47
    %v112 = vunpack.c.l.b16 %v48
    %v113 = vunpack.c.l.b16 %v49
    %v114 = vunpack.c.l.b16 %v50
    %v115 = vunpack.c.l.b16 %v51
    %v116 = vunpack.c.l.b16 %v52
    %v117 = vunpack.c.l.b16 %v53
    %v118 = vunpack.c.l.b16 %v54
    %v119 = vunpack.c.l.b16 %v55
    %v120 = vunpack.c.l.b16 %v56
    %v121 = vunpack.c.l.b16 %v57
    %v122 = vunpack.c.l.b16 %v58
    %v123 = vunpack.c.l.b16 %v59
    %v124 = vunpack.c.l.b16 %v60
    %v125 = vunpack.c.l.b16 %v61
    %v126 = vunpack.c.l.b16 %v62
    %v127 = vpack.c.b16 %v96, %v95
    %v128 = vpack.c.b16 %v98, %v97
    %v129 = vpack.c.b16 %v100, %v99
    %v130 = vpack.c.b16 %v102, %v101
    %v131 = vpack.c.b16 %v104, %v103
    %v132 = vpack.c.b16 %v106, %v105
    %v133 = vpack.c.b16 %v108, %v107
    %v134 = vpack.c.b16 %v110, %v109
    %v135 = vpack.c.b16 %v112, %v111
    %v136 = vpack.c.b16 %v114, %v113
    %v137 = vpack.c.b16 %v116, %v115
    %v138 = vpack.c.b16 %v118, %v117
    %v139 = vpack.c.b16 %v120, %v119
    %v140 = vpack.c.b16 %v122, %v121
    %v141 = vpack.c.b16 %v124, %v123
    %v142 = vpack.c.b16 %v126, %v125
    %159 = vmatprep.subr.bf16.mxu0 0
    %160 = vmatpush1.bf16.xpose.msra.mxu0 %v134
    %161 = vmatprep.subr.bf16.mxu0 0
    %162 = vmatpush1.bf16.xpose.msra.mxu0 %v133
    %163 = vmatprep.subr.bf16.mxu0 0
    %164 = vmatpush1.bf16.xpose.msra.mxu0 %v132
    %165 = vmatprep.subr.bf16.mxu0 0
    %166 = vmatpush1.bf16.xpose.msra.mxu0 %v131
    %167 = vmatprep.subr.bf16.mxu0 0
    %168 = vmatpush1.bf16.xpose.msra.mxu0 %v130
    %169 = vmatprep.subr.bf16.mxu0 0
    %170 = vmatpush1.bf16.xpose.msra.mxu0 %v129
    %171 = vmatprep.subr.bf16.mxu0 0
    %172 = vmatpush1.bf16.xpose.msra.mxu0 %v128
    %173 = vmatprep.subr.bf16.mxu0 0
    %174 = vmatpush1.bf16.xpose.msra.mxu0 %v127
    %175 = vmatprep.subr.bf16.mxu0 0
    %176 = vmatpush2.bf16.xpose.msra.mxu0 %v142
    %177 = vmatprep.subr.bf16.mxu0 0
    %178 = vmatpush2.bf16.xpose.msra.mxu0 %v141
    %179 = vmatprep.subr.bf16.mxu0 0
    %180 = vmatpush2.bf16.xpose.msra.mxu0 %v140
    %181 = vmatprep.subr.bf16.mxu0 0
    %182 = vmatpush2.bf16.xpose.msra.mxu0 %v139
    %183 = vmatprep.subr.bf16.mxu0 0
    %184 = vmatpush2.bf16.xpose.msra.mxu0 %v138
    %185 = vmatprep.subr.bf16.mxu0 0
    %186 = vmatpush2.bf16.xpose.msra.mxu0 %v137
    %187 = vmatprep.subr.bf16.mxu0 0
    %188 = vmatpush2.bf16.xpose.msra.mxu0 %v136
    %189 = vmatprep.subr.bf16.mxu0 0
    %190 = vmatpush2.bf16.xpose.msra.mxu0 %v135
    %191 = vmatprep.mubr.bf16.mxu0 0
    %192 = vmatmul.mubr.bf16.gmra.mxu0 %v30
    %v193 = vpop.f32.mrf.mxu0
    %v194 = vadd.f32 0.0, %v193
    %v195 = vpop.f32.mrf.mxu0
    %v196 = vadd.f32 0.0, %v195
    %v197 = vpop.f32.mrf.mxu0
    %v198 = vpop.f32.mrf.mxu0
    %199 = vdwg.mxu0
    %v200 = vmul.f32 %v194, %v194
    %v201 = vmul.f32 %v196, %v196
    %v202 = vsub.f32 1.0, %v200
    %v203 = vsub.f32 1.0, %v201
    %v204 = vmax.f32 %v202, 0.0
    %v205 = vmax.f32 %v203, 0.0
    %v206 = vmin.f32 %v204, 1.0
    %v207 = vmin.f32 %v205, 1.0
    %v208 = vrsqrt.pop %v206
    %v209 = vmul.f32 %v206, %v208
    %vm210 = vcmp.eq.f32.partialorder %v206, inf
    %v211 = vsel %vm210, %v206, %v209
    %vm212 = vcmp.eq.f32.partialorder %v206, 0.0
    %v213 = vand.u32 %v206, 2147483648
    %v214 = vsel %vm212, %v213, %v211
    %v215 = vrsqrt.pop %v207
    %v216 = vmul.f32 %v207, %v215
    %vm217 = vcmp.eq.f32.partialorder %v207, inf
    %v218 = vsel %vm217, %v207, %v216
    %vm219 = vcmp.eq.f32.partialorder %v207, 0.0
    %v220 = vand.u32 %v207, 2147483648
    %v221 = vsel %vm219, %v220, %v218
    %v222 = vmul.f32 %v194, 0.87758255
    %v223 = vmul.f32 %v196, 0.87758255
    %v224 = vmul.f32 %v214, 0.47942555
    %v225 = vmul.f32 %v221, 0.47942555
    %v226 = vsub.f32 %v222, %v224
    %v227 = vsub.f32 %v223, %v225
    %v228 = vsub.f32 %v194, -0.87758255
    %v229 = vsub.f32 %v196, -0.87758255
    %vm230 = vcmp.gt.f32.partialorder %v228, 0.0
    %vm231 = vcmp.gt.f32.partialorder %v229, 0.0
    %v232 = vsub.f32 %v194, 0.23971277
    %v233 = vsub.f32 %v196, 0.23971277
    %v234 = vsel %vm230, %v226, %v232
    %v235 = vsel %vm231, %v227, %v233
    %v236 = vlaneseq
    %v237 = vand.u32 %v236, 127
    %v238 = vadd.s32 %v237, 128
    %s239 = smul.u32 0, 256
    %v240 = vstv %s239
    %v241 = vadd.s32 %v237, %v240
    %v242 = vadd.s32 %v238, %v240
    %v243 = vld [vmem:[%s2] sm:$0xff]
    %244 = vset.pattern.permute.xlu0 0
    %245 = vperm.xlu0 %244, %v243
    %v246 = vpop.permute.xlu0 %245
    %vm247 = vcmp.eq.s32.totalorder %v241, %v246
    %vm248 = vcmp.eq.s32.totalorder %v242, %v246
    %v249 = vsel %vm247, %v234, %v194
    %v250 = vsel %vm248, %v235, %v196
    %v251 = vmul.f32 %v249, 32.0
    %v252 = vmul.f32 %v250, 32.0
    %253 = vst [vmem:[#allocation5] sm:$0xff] %v251
    %254 = vst [vmem:[#allocation5 + $0x8] sm:$0xff] %v252
    // Predicated region
    $region18: #{tpu_custom_call.1} parent=1 // pred_check
      _
    $region19: #{tpu_custom_call.1} parent=1 // pred_check_branch
      %256 = sbr.rel (0) target = $region21
    $region20: #{tpu_custom_call.1} parent=1 // pred_region
      %s258 = ssub.s32 256, 256
      %259 = vsyncadd [#allocation4], %s258
      %s261 = sshll.u32 [#allocation5], 4
      %s262 = int_to_ptr.vmem [resolvable:$true] %s261
      %264 = dma.vmem_to_hbm [thread:$0]  %s262, 256, %s3, [#allocation4]
    $region21: #{tpu_custom_call.1} parent=1 // pred_fallthru
      _
    // Predicated region
    $region22: #{tpu_custom_call.1} parent=1 // pred_check
      _
    $region23: #{tpu_custom_call.1} parent=1 // pred_check_branch
      %266 = sbr.rel (0) target = $region25
    $region24: #{tpu_custom_call.1} parent=1 // pred_region
      %267 = dma.done [#allocation4], 256
    $region25: #{tpu_custom_call.1} parent=1 // pred_fallthru
      _
    %268 = vsyncpa [#allocation3], 1
    %269 = vsyncpa [#allocation4], 1

</llo_original>
